<compile_context>
chip_gen: v7x
topology: tpu7x:2x2x1
jax: 0.10.0
libtpu: 0.0.40
codegen_flags: <defaults>
</compile_context>

<pallas_src>
import functools
import math

import jax
import jax.numpy as jnp
from jax import lax
from jax.experimental import pallas as pl
from jax.experimental.pallas import tpu as pltpu


_EPS_SQ = 1e-24  # (1e-12)^2: clamping sum-of-squares == clamping ||x|| at 1e-12


def _round_up(x, k):
    return (x + k - 1) // k * k


# ---------------------------------------------------------------------------
# Kernel 1: row-wise L2 normalization of the weights.
#   (a) f32 output only; (b) f32 output + low-precision copy for the MXU.
# ---------------------------------------------------------------------------
def _w_norm_kernel(w_ref, wn_ref):
    x = w_ref[...].astype(jnp.float32)                                   # (TN, Ep)
    inv = lax.rsqrt(jnp.maximum(jnp.sum(x * x, axis=1, keepdims=True), _EPS_SQ))
    wn_ref[...] = (x * inv).astype(wn_ref.dtype)


def _w_norm2_kernel(w_ref, wn_ref, wmm_ref):
    x = w_ref[...].astype(jnp.float32)
    inv = lax.rsqrt(jnp.maximum(jnp.sum(x * x, axis=1, keepdims=True), _EPS_SQ))
    xn = x * inv
    wn_ref[...] = xn.astype(wn_ref.dtype)
    wmm_ref[...] = xn.astype(wmm_ref.dtype)


# ---------------------------------------------------------------------------
# Kernel 2: row-wise L2 normalization + scale of the embedding.
#   (a) s_emb (f32) only -- kernel 3 folds 1/s back in;
#   (b) s_emb (f32) + unscaled normalized low-precision copy for the MXU.
# ---------------------------------------------------------------------------
def _emb_norm_kernel(x_ref, semb_ref, *, s):
    x = x_ref[...].astype(jnp.float32)                                   # (TM, Ep)
    inv = lax.rsqrt(jnp.maximum(jnp.sum(x * x, axis=1, keepdims=True), _EPS_SQ))
    semb_ref[...] = (jnp.float32(s) * (x * inv)).astype(semb_ref.dtype)


def _emb_norm2_kernel(x_ref, semb_ref, embmm_ref, *, s):
    x = x_ref[...].astype(jnp.float32)
    inv = lax.rsqrt(jnp.maximum(jnp.sum(x * x, axis=1, keepdims=True), _EPS_SQ))
    xn = x * inv
    semb_ref[...] = (jnp.float32(s) * xn).astype(semb_ref.dtype)
    embmm_ref[...] = xn.astype(embmm_ref.dtype)


# ---------------------------------------------------------------------------
# Kernel 3: tiled cosine logits + fused margin.
#   emb_ref / w_ref already arrive in the matmul dtype (f32 or bf16).
# ---------------------------------------------------------------------------
def _logits_kernel(lab_ref, emb_ref, w_ref, logits_ref, mlogits_ref,
                   *, s, m, tn, inv_emb_scale):
    # Contract dim 1 of both operands: standard (M,K)x(N,K) MXU form, no
    # in-kernel transpose / XLU relayout of the (TN, Ep) weight tile.
    dot = lax.dot_general(
        emb_ref[...], w_ref[...],
        dimension_numbers=(((1,), (1,)), ((), ())),
        preferred_element_type=jnp.float32)                              # (TM, TN)

    if inv_emb_scale != 1.0:          # f32 path: emb tile is s * normalize(emb)
        logits = dot * jnp.float32(inv_emb_scale)
    else:                              # bf16 path: emb tile is normalize(emb)
        logits = dot

    # Margin: compare a (1, TN) lane iota against (label - col0).
    labels = lab_ref[...]                                                # (TM, 1)
    col0 = pl.program_id(1) * tn
    cls = lax.broadcasted_iota(jnp.int32, (1, tn), 1)
    hit = cls == (labels - col0)                                          # (TM, TN)

    logits_ref[...] = logits
    mlogits_ref[...] = (jnp.float32(s) * logits
                        - jnp.where(hit, jnp.float32(s * m), jnp.float32(0.0)))


# ---------------------------------------------------------------------------
# Wrapper.
# ---------------------------------------------------------------------------
def lmcl_forward(embedding, label, weights, s, m, *,
                 tm=512, tn=512, matmul_dtype=None, vmem_budget=44 << 20):
    """LMCL forward. Returns (logits, m_logits, s*normalize(emb), normalize(w)).

    matmul_dtype=None selects bf16 MXU operands (f32 accumulation) when
    E >= 256 (MXU-bound regime, ~1e-3 parity) and f32 otherwise; pass
    jnp.float32 / jnp.bfloat16 explicitly to override.
    """
    B, E = embedding.shape
    C, E2 = weights.shape
    assert E == E2, "embedding size wrong"

    if matmul_dtype is None:
        matmul_dtype = jnp.bfloat16 if E >= 256 else jnp.float32
    use_mm_copy = jnp.dtype(matmul_dtype) != jnp.dtype(jnp.float32)
    mm_bytes = jnp.dtype(matmul_dtype).itemsize

    f32 = jnp.float32
    Ep = _round_up(E, 128)
    TM = min(tm, _round_up(B, 8))     # batch tile (sublane-aligned)
    TN = min(tn, _round_up(C, 128))   # class tile (lane-aligned)

    # VMEM-aware tile selection: keep the largest double-buffered working set
    # of the three launches under `vmem_budget` (safe on v7x's 64 MiB VMEM).
    extra = mm_bytes if use_mm_copy else 0

    def _ws(TM, TN):
        ws1 = 2 * TN * Ep * (4 + 4 + extra)                 # kernel 1
        ws2 = 2 * TM * Ep * (4 + 4 + extra)                 # kernel 2
        ws3 = (2 * TM * Ep * mm_bytes + 2 * TN * Ep * mm_bytes
               + 2 * TM * 128 * 4                            # lane-padded labels
               + 2 * 2 * TM * TN * 4)                        # two f32 output tiles
        return max(ws1, ws2, ws3)

    while _ws(TM, TN) > vmem_budget and TN > 128:
        TN = max(128, _round_up(TN // 2, 128))
    while _ws(TM, TN) > vmem_budget and TM > 8:
        TM = max(8, _round_up(TM // 2, 8))
    # TODO(synk): for extreme E, a K grid axis ("arbitrary") + f32 accumulator
    # scratch would keep tiles large; tile shrinking suffices for typical LMCL.

    Bp = _round_up(B, TM)
    Cp = _round_up(C, TN)

    emb_in = embedding.astype(f32)
    w_in = weights.astype(f32)
    lab_in = label.astype(jnp.int32).reshape(B, 1)

    # Pad only when shapes are not already aligned (zero padding is exact for
    # L2 normalization and the dot product).
    if (Bp, Ep) != (B, E):
        emb_in = jnp.pad(emb_in, ((0, Bp - B), (0, Ep - E)))
    if (Cp, Ep) != (C, E):
        w_in = jnp.pad(w_in, ((0, Cp - C), (0, Ep - E)))
    if Bp != B:
        lab_in = jnp.pad(lab_in, ((0, Bp - B), (0, 0)))

    vmem_limit = int(min(max(_ws(TM, TN) + (8 << 20), 32 << 20), 60 << 20))
    par1 = pltpu.CompilerParams(dimension_semantics=("parallel",),
                                vmem_limit_bytes=vmem_limit)
    par2 = pltpu.CompilerParams(dimension_semantics=("parallel", "parallel"),
                                vmem_limit_bytes=vmem_limit)

    # (1) w_norm = normalize(weights); optional bf16 copy for the MXU stream.
    if use_mm_copy:
        w_norm, w_mm = pl.pallas_call(
            _w_norm2_kernel,
            out_shape=(jax.ShapeDtypeStruct((Cp, Ep), f32),
                       jax.ShapeDtypeStruct((Cp, Ep), matmul_dtype)),
            grid=(Cp // TN,),
            in_specs=[pl.BlockSpec((TN, Ep), lambda i: (i, 0))],
            out_specs=(pl.BlockSpec((TN, Ep), lambda i: (i, 0)),
                       pl.BlockSpec((TN, Ep), lambda i: (i, 0))),
            compiler_params=par1,
        )(w_in)
    else:
        w_norm = pl.pallas_call(
            _w_norm_kernel,
            out_shape=jax.ShapeDtypeStruct((Cp, Ep), f32),
            grid=(Cp // TN,),
            in_specs=[pl.BlockSpec((TN, Ep), lambda i: (i, 0))],
            out_specs=pl.BlockSpec((TN, Ep), lambda i: (i, 0)),
            compiler_params=par1,
        )(w_in)
        w_mm = w_norm

    # (2) s_emb = s * normalize(embedding) (module output); optional bf16 copy.
    if use_mm_copy:
        s_emb, emb_mm = pl.pallas_call(
            functools.partial(_emb_norm2_kernel, s=float(s)),
            out_shape=(jax.ShapeDtypeStruct((Bp, Ep), f32),
                       jax.ShapeDtypeStruct((Bp, Ep), matmul_dtype)),
            grid=(Bp // TM,),
            in_specs=[pl.BlockSpec((TM, Ep), lambda i: (i, 0))],
            out_specs=(pl.BlockSpec((TM, Ep), lambda i: (i, 0)),
                       pl.BlockSpec((TM, Ep), lambda i: (i, 0))),
            compiler_params=par1,
        )(emb_in)
        inv_emb_scale = 1.0        # emb_mm is already unit-norm
    else:
        s_emb = pl.pallas_call(
            functools.partial(_emb_norm_kernel, s=float(s)),
            out_shape=jax.ShapeDtypeStruct((Bp, Ep), f32),
            grid=(Bp // TM,),
            in_specs=[pl.BlockSpec((TM, Ep), lambda i: (i, 0))],
            out_specs=pl.BlockSpec((TM, Ep), lambda i: (i, 0)),
            compiler_params=par1,
        )(emb_in)
        emb_mm = s_emb
        inv_emb_scale = 1.0 / float(s)   # fold the scale back out of the dot

    # (3) logits / m_logits over a (batch-tile, class-tile) grid; no resident
    #     outputs, so both axes stay "parallel" (megacore-shardable on v7x).
    logits_p, mlogits_p = pl.pallas_call(
        functools.partial(_logits_kernel, s=float(s), m=float(m), tn=TN,
                          inv_emb_scale=inv_emb_scale),
        out_shape=(jax.ShapeDtypeStruct((Bp, Cp), f32),
                   jax.ShapeDtypeStruct((Bp, Cp), f32)),
        grid=(Bp // TM, Cp // TN),
        in_specs=[
            pl.BlockSpec((TM, 1), lambda i, j: (i, 0)),    # labels (re-DMA only on i change)
            pl.BlockSpec((TM, Ep), lambda i, j: (i, 0)),   # emb tile: resident across j
            pl.BlockSpec((TN, Ep), lambda i, j: (j, 0)),   # w tile per class block
        ],
        out_specs=(pl.BlockSpec((TM, TN), lambda i, j: (i, j)),
                   pl.BlockSpec((TM, TN), lambda i, j: (i, j))),
        compiler_params=par2,
    )(lab_in, emb_mm, w_mm)

    # Slice back only when padding actually happened.
    logits = logits_p if (Bp, Cp) == (B, C) else logits_p[:B, :C]
    m_logits = mlogits_p if (Bp, Cp) == (B, C) else mlogits_p[:B, :C]
    s_emb_out = s_emb if (Bp, Ep) == (B, E) else s_emb[:B, :E]
    w_norm_out = w_norm if (Cp, Ep) == (C, E) else w_norm[:C, :E]
    return logits, m_logits, s_emb_out, w_norm_out


if __name__ == "__main__":
    # Small shapes consistent with the module's forward.
    B = 8            # batch
    E = 32           # embedding_size
    C = 16           # num_classes
    s = 30.0
    m = 0.35

    key = jax.random.PRNGKey(0)
    k_emb, k_w, k_lab = jax.random.split(key, 3)

    embedding = jax.random.normal(k_emb, (B, E), dtype=jnp.float32)
    label = jax.random.randint(k_lab, (B,), 0, C, dtype=jnp.int32)

    # Deterministic kaiming_normal_-style init for weights (C, E):
    # torch default mode='fan_in' (=E), gain=sqrt(2) -> std = sqrt(2/E)
    std = math.sqrt(2.0 / E)
    weights = std * jax.random.normal(k_w, (C, E), dtype=jnp.float32)

    # Reference in plain JAX (same math as the PyTorch forward).
    def ref_norm(x):
        return x / jnp.maximum(jnp.linalg.norm(x, axis=1, keepdims=True), 1e-12)

    ref_logits = ref_norm(embedding) @ ref_norm(weights).T
    ref_margin = jax.nn.one_hot(label, C, dtype=jnp.float32) * m
    ref_mlogits = s * (ref_logits - ref_margin)
    ref_semb = s * ref_norm(embedding)
    ref_wnorm = ref_norm(weights)

    # f32 MXU path (default for E < 256): tight parity with the f32 reference.
    logits, m_logits, s_emb, w_norm = lmcl_forward(embedding, label, weights, s, m)
    jax.block_until_ready((logits, m_logits, s_emb, w_norm))

    assert jnp.allclose(logits, ref_logits, atol=1e-4, rtol=1e-3)
    assert jnp.allclose(m_logits, ref_mlogits, atol=1e-3, rtol=1e-3)
    assert jnp.allclose(s_emb, ref_semb, atol=1e-3, rtol=1e-3)
    assert jnp.allclose(w_norm, ref_wnorm, atol=1e-4, rtol=1e-3)

    # bf16 MXU path (default for E >= 256): exercise it here with loose tolerances.
    logits_b, m_logits_b, s_emb_b, w_norm_b = lmcl_forward(
        embedding, label, weights, s, m, matmul_dtype=jnp.bfloat16)
    jax.block_until_ready((logits_b, m_logits_b, s_emb_b, w_norm_b))

    assert jnp.allclose(logits_b, ref_logits, atol=3e-2)
    assert jnp.allclose(m_logits_b, ref_mlogits, atol=1.0)
    assert jnp.allclose(s_emb_b, ref_semb, atol=1e-3, rtol=1e-3)   # f32 output path
    assert jnp.allclose(w_norm_b, ref_wnorm, atol=1e-4, rtol=1e-3)

    print("KERNEL_OK")
</pallas_src>

<mosaic_0001>
module attributes {stable_mosaic.version = 11 : i64} {
  func.func @_w_norm_kernel(%arg0: i32, %arg1: memref<128x128xf32, #tpu.memory_space<vmem>>, %arg2: memref<128x128xf32, #tpu.memory_space<vmem>>) attributes {dimension_semantics = [#tpu.dimension_semantics<parallel>], iteration_bounds = array<i64: 1>, scalar_prefetch = 0 : i64, scratch_operands = 0 : i64, tpu.core_type = #tpu.core_type<tc>, window_params = [{transform_indices = @transform_0, window_bounds = array<i64: 128, 128>}, {transform_indices = @transform_1, window_bounds = array<i64: 128, 128>}]} {
    %c0 = arith.constant 0 : index
    %c0_0 = arith.constant 0 : index
    %0 = vector.load %arg1[%c0, %c0_0] : memref<128x128xf32, #tpu.memory_space<vmem>>, vector<128x128xf32>
    %1 = arith.mulf %0, %0 : vector<128x128xf32>
    %cst = arith.constant dense<0.000000e+00> : vector<128xf32>
    %2 = vector.multi_reduction <add>, %1, %cst [1] : vector<128x128xf32> to vector<128xf32>
    %3 = vector.shape_cast %2 : vector<128xf32> to vector<128x1xf32>
    %cst_1 = arith.constant 1.000000e-24 : f32
    %4 = vector.broadcast %cst_1 : f32 to vector<128x1xf32>
    %5 = arith.maximumf %3, %4 : vector<128x1xf32>
    %6 = math.rsqrt %5 : vector<128x1xf32>
    %7 = vector.broadcast %6 : vector<128x1xf32> to vector<128x128xf32>
    %8 = arith.mulf %0, %7 : vector<128x128xf32>
    %c0_2 = arith.constant 0 : index
    %c0_3 = arith.constant 0 : index
    %9 = vector.load %arg2[%c0_2, %c0_3] : memref<128x128xf32, #tpu.memory_space<vmem>>, vector<128x128xf32>
    tpu.vector_store %arg2[%c0_2, %c0_3], %8 {strides = array<i32>} : memref<128x128xf32, #tpu.memory_space<vmem>>, vector<128x128xf32>,
    return
  }
  func.func @transform_0(%arg0: i32) -> (i32, i32) {
    %c0_i32 = arith.constant 0 : i32
    %c0_i32_0 = arith.constant 0 : i32
    return %arg0, %c0_i32 : i32, i32
  }
  func.func @transform_1(%arg0: i32) -> (i32, i32) {
    %c0_i32 = arith.constant 0 : i32
    %c0_i32_0 = arith.constant 0 : i32
    return %arg0, %c0_i32 : i32, i32
  }
}

</mosaic_0001>

<llo_original>
// kernel: tpu_custom_call.1
$region0: #{tpu_custom_call.1}
  #allocation0 [shape = 'u32[]', space=smem, size = 0x4, offset = 0x4, fixed_abs, tag = 'smem constant byte address 0x4 - core index']
  #allocation1 [shape = 'u32[144,128]{1,0:T(1,128)}', space=vmem, size = 0x12000, scoped, tag = 'internal scratch']
  %s0 = inlined_call_operand.hbm [shape: f32[128,128], index: 0, kind: input, shape index: {}]
  %s1 = inlined_call_operand.hbm [shape: f32[128,128], index: 1, kind: output, shape index: {}]
  %s2 = sld [smem:[#allocation0]]
  $region18: #{tpu_custom_call.1} parent=0
    _
  %s4 = ssub.s32 1, %s2
  %s5 = scalar_select 0, %s4, %s2
  $region1: #{tpu_custom_call.1} parent=0
    #allocation2 [shape = 'u8[65536]{0}', space=vmem, size = 0x10000, scoped, tag = 'input window, operand 0, single buffered']
    #allocation3 [shape = 's32[1]{0}', space=sflag, size = 0x4, scoped, tag = 'scoped memory for tpu_custom_call.1']
    #allocation4 [shape = 's32[1]{0}', space=sflag, size = 0x4, scoped, tag = 'scoped memory for tpu_custom_call.1']
    #allocation5 [shape = 'u8[65536]{0}', space=vmem, size = 0x10000, scoped, tag = 'output window, operand 0, single buffered']
    %6 = vsyncpa [#allocation3], 0
    %7 = vsyncpa [#allocation4], 0
    // Predicated region
    $region2: #{tpu_custom_call.1} parent=1 // pred_check
      _
    $region3: #{tpu_custom_call.1} parent=1 // pred_check_branch
      %9 = sbr.rel (0) target = $region5
    $region4: #{tpu_custom_call.1} parent=1 // pred_region
      %s11 = ssub.s32 2048, 2048
      %12 = vsyncadd [#allocation3], %s11
      %s13 = sshll.u32 [#allocation2], 4
      %s14 = int_to_ptr.vmem [resolvable:$true] %s13
      %19 = dma.hbm_to_vmem [thread:$0]  %s0, 2048, %s14, [#allocation3], 128, 128, 8
    $region5: #{tpu_custom_call.1} parent=1 // pred_fallthru
      _
    // Predicated region
    $region6: #{tpu_custom_call.1} parent=1 // pred_check
      _
    $region7: #{tpu_custom_call.1} parent=1 // pred_check_branch
      %21 = sbr.rel (0) target = $region9
    $region8: #{tpu_custom_call.1} parent=1 // pred_region
      %22 = dma.done [#allocation3], 2048
    $region9: #{tpu_custom_call.1} parent=1 // pred_fallthru
      _
    %v23 = vld [vmem:[#allocation2] sm:$0xff]
    %v24 = vld [vmem:[#allocation2 + $0x8] sm:$0xff]
    %v25 = vld [vmem:[#allocation2 + $0x10] sm:$0xff]
    %v26 = vld [vmem:[#allocation2 + $0x18] sm:$0xff]
    %v27 = vld [vmem:[#allocation2 + $0x20] sm:$0xff]
    %v28 = vld [vmem:[#allocation2 + $0x28] sm:$0xff]
    %v29 = vld [vmem:[#allocation2 + $0x30] sm:$0xff]
    %v30 = vld [vmem:[#allocation2 + $0x38] sm:$0xff]
    %v31 = vld [vmem:[#allocation2 + $0x40] sm:$0xff]
    %v32 = vld [vmem:[#allocation2 + $0x48] sm:$0xff]
    %v33 = vld [vmem:[#allocation2 + $0x50] sm:$0xff]
    %v34 = vld [vmem:[#allocation2 + $0x58] sm:$0xff]
    %v35 = vld [vmem:[#allocation2 + $0x60] sm:$0xff]
    %v36 = vld [vmem:[#allocation2 + $0x68] sm:$0xff]
    %v37 = vld [vmem:[#allocation2 + $0x70] sm:$0xff]
    %v38 = vld [vmem:[#allocation2 + $0x78] sm:$0xff]
    %v39 = vmul.f32 %v23, %v23
    %v40 = vmul.f32 %v24, %v24
    %v41 = vmul.f32 %v25, %v25
    %v42 = vmul.f32 %v26, %v26
    %v43 = vmul.f32 %v27, %v27
    %v44 = vmul.f32 %v28, %v28
    %v45 = vmul.f32 %v29, %v29
    %v46 = vmul.f32 %v30, %v30
    %v47 = vmul.f32 %v31, %v31
    %v48 = vmul.f32 %v32, %v32
    %v49 = vmul.f32 %v33, %v33
    %v50 = vmul.f32 %v34, %v34
    %v51 = vmul.f32 %v35, %v35
    %v52 = vmul.f32 %v36, %v36
    %v53 = vmul.f32 %v37, %v37
    %v54 = vmul.f32 %v38, %v38
    %55 = vadd.xlane.f32.xlu0 %v39
    %v56 = vpop.xlane.xlu0 %55
    %57 = vadd.xlane.f32.xlu0 %v40
    %v58 = vpop.xlane.xlu0 %57
    %59 = vadd.xlane.f32.xlu0 %v41
    %v60 = vpop.xlane.xlu0 %59
    %61 = vadd.xlane.f32.xlu0 %v42
    %v62 = vpop.xlane.xlu0 %61
    %63 = vadd.xlane.f32.xlu0 %v43
    %v64 = vpop.xlane.xlu0 %63
    %65 = vadd.xlane.f32.xlu0 %v44
    %v66 = vpop.xlane.xlu0 %65
    %67 = vadd.xlane.f32.xlu0 %v45
    %v68 = vpop.xlane.xlu0 %67
    %69 = vadd.xlane.f32.xlu0 %v46
    %v70 = vpop.xlane.xlu0 %69
    %71 = vadd.xlane.f32.xlu0 %v47
    %v72 = vpop.xlane.xlu0 %71
    %73 = vadd.xlane.f32.xlu0 %v48
    %v74 = vpop.xlane.xlu0 %73
    %75 = vadd.xlane.f32.xlu0 %v49
    %v76 = vpop.xlane.xlu0 %75
    %77 = vadd.xlane.f32.xlu0 %v50
    %v78 = vpop.xlane.xlu0 %77
    %79 = vadd.xlane.f32.xlu0 %v51
    %v80 = vpop.xlane.xlu0 %79
    %81 = vadd.xlane.f32.xlu0 %v52
    %v82 = vpop.xlane.xlu0 %81
    %83 = vadd.xlane.f32.xlu0 %v53
    %v84 = vpop.xlane.xlu0 %83
    %85 = vadd.xlane.f32.xlu0 %v54
    %v86 = vpop.xlane.xlu0 %85
    %v87 = vmax.f32 %v56, 1e-24
    %v88 = vmax.f32 %v58, 1e-24
    %v89 = vmax.f32 %v60, 1e-24
    %v90 = vmax.f32 %v62, 1e-24
    %v91 = vmax.f32 %v64, 1e-24
    %v92 = vmax.f32 %v66, 1e-24
    %v93 = vmax.f32 %v68, 1e-24
    %v94 = vmax.f32 %v70, 1e-24
    %v95 = vmax.f32 %v72, 1e-24
    %v96 = vmax.f32 %v74, 1e-24
    %v97 = vmax.f32 %v76, 1e-24
    %v98 = vmax.f32 %v78, 1e-24
    %v99 = vmax.f32 %v80, 1e-24
    %v100 = vmax.f32 %v82, 1e-24
    %v101 = vmax.f32 %v84, 1e-24
    %v102 = vmax.f32 %v86, 1e-24
    %v103 = vrsqrt.pop %v87
    %v104 = vrsqrt.pop %v88
    %v105 = vrsqrt.pop %v89
    %v106 = vrsqrt.pop %v90
    %v107 = vrsqrt.pop %v91
    %v108 = vrsqrt.pop %v92
    %v109 = vrsqrt.pop %v93
    %v110 = vrsqrt.pop %v94
    %v111 = vrsqrt.pop %v95
    %v112 = vrsqrt.pop %v96
    %v113 = vrsqrt.pop %v97
    %v114 = vrsqrt.pop %v98
    %v115 = vrsqrt.pop %v99
    %v116 = vrsqrt.pop %v100
    %v117 = vrsqrt.pop %v101
    %v118 = vrsqrt.pop %v102
    %v119 = vmul.f32 %v23, %v103
    %v120 = vmul.f32 %v24, %v104
    %v121 = vmul.f32 %v25, %v105
    %v122 = vmul.f32 %v26, %v106
    %v123 = vmul.f32 %v27, %v107
    %v124 = vmul.f32 %v28, %v108
    %v125 = vmul.f32 %v29, %v109
    %v126 = vmul.f32 %v30, %v110
    %v127 = vmul.f32 %v31, %v111
    %v128 = vmul.f32 %v32, %v112
    %v129 = vmul.f32 %v33, %v113
    %v130 = vmul.f32 %v34, %v114
    %v131 = vmul.f32 %v35, %v115
    %v132 = vmul.f32 %v36, %v116
    %v133 = vmul.f32 %v37, %v117
    %v134 = vmul.f32 %v38, %v118
    %135 = vst [vmem:[#allocation5] sm:$0xff] %v119
    %136 = vst [vmem:[#allocation5 + $0x8] sm:$0xff] %v120
    %137 = vst [vmem:[#allocation5 + $0x10] sm:$0xff] %v121
    %138 = vst [vmem:[#allocation5 + $0x18] sm:$0xff] %v122
    %139 = vst [vmem:[#allocation5 + $0x20] sm:$0xff] %v123
    %140 = vst [vmem:[#allocation5 + $0x28] sm:$0xff] %v124
    %141 = vst [vmem:[#allocation5 + $0x30] sm:$0xff] %v125
    %142 = vst [vmem:[#allocation5 + $0x38] sm:$0xff] %v126
    %143 = vst [vmem:[#allocation5 + $0x40] sm:$0xff] %v127
    %144 = vst [vmem:[#allocation5 + $0x48] sm:$0xff] %v128
    %145 = vst [vmem:[#allocation5 + $0x50] sm:$0xff] %v129
    %146 = vst [vmem:[#allocation5 + $0x58] sm:$0xff] %v130
    %147 = vst [vmem:[#allocation5 + $0x60] sm:$0xff] %v131
    %148 = vst [vmem:[#allocation5 + $0x68] sm:$0xff] %v132
    %149 = vst [vmem:[#allocation5 + $0x70] sm:$0xff] %v133
    %150 = vst [vmem:[#allocation5 + $0x78] sm:$0xff] %v134
    // Predicated region
    $region10: #{tpu_custom_call.1} parent=1 // pred_check
      _
    $region11: #{tpu_custom_call.1} parent=1 // pred_check_branch
      %152 = sbr.rel (0) target = $region13
    $region12: #{tpu_custom_call.1} parent=1 // pred_region
      %s154 = ssub.s32 2048, 2048
      %155 = vsyncadd [#allocation4], %s154
      %s156 = sshll.u32 [#allocation5], 4
      %s157 = int_to_ptr.vmem [resolvable:$true] %s156
      %162 = dma.vmem_to_hbm [thread:$0]  %s157, 2048, %s1, [#allocation4], 128, 128, 8
    $region13: #{tpu_custom_call.1} parent=1 // pred_fallthru
      _
    // Predicated region
    $region14: #{tpu_custom_call.1} parent=1 // pred_check
      _
    $region15: #{tpu_custom_call.1} parent=1 // pred_check_branch
      %164 = sbr.rel (0) target = $region17
    $region16: #{tpu_custom_call.1} parent=1 // pred_region
      %165 = dma.done [#allocation4], 2048
    $region17: #{tpu_custom_call.1} parent=1 // pred_fallthru
      _
    %166 = vsyncpa [#allocation3], 1
    %167 = vsyncpa [#allocation4], 1

</llo_original>
